<compile_context>
chip_gen: v7x
topology: tpu7x:2x2x1
jax: 0.10.0
libtpu: 0.0.40
codegen_flags: <defaults>
</compile_context>

<pallas_src>
import functools

import jax
import jax.numpy as jnp
from jax.experimental import pallas as pl
from jax.experimental.pallas import tpu as pltpu

EPS = 1e-12  # BERT LayerNorm eps


def _round_up(a, b):
    return (a + b - 1) // b * b


def _cdiv(a, b):
    return -(-a // b)


def _vmem_ceiling():
    """Per-generation scoped-VMEM ceiling (physical: 128 MiB v5/v6, 64 MiB v7x)."""
    try:
        kind = jax.devices()[0].device_kind.lower()
    except Exception:
        kind = ""
    if "v5" in kind or "v6" in kind:
        return 100 << 20
    return 56 << 20          # v7x and unknown generations: stay under 64 MiB


# --------------------------------------------------------------------------- #
# Kernel: fused matmul + embedding sum + LayerNorm over row tiles.
# --------------------------------------------------------------------------- #
def image_bert_emb_kernel(x_ref, w_ref, extras_ref, gamma_ref, beta_ref, o_ref,
                          *, h_real):
    # x_ref:      (TILE_M, Din_pad)   compute_dtype (zero padded K columns)
    # w_ref:      (Din_pad, H_pad)    compute_dtype (zero padded rows/cols)
    # extras_ref: (TILE_M, H_pad)     compute_dtype (word+pos+type + gated bias)
    # gamma/beta: (1, H_pad)          f32 (zero in padded lanes)
    # o_ref:      (TILE_M, H_pad)     out dtype
    proj = jnp.dot(x_ref[...], w_ref[...], preferred_element_type=jnp.float32)
    e = proj + extras_ref[...].astype(jnp.float32)            # (TILE_M, H_pad) f32

    # One-pass moments: padded lanes contribute exactly zero to both sums.
    inv_h = 1.0 / h_real
    s1 = jnp.sum(e, axis=-1, keepdims=True)
    s2 = jnp.sum(e * e, axis=-1, keepdims=True)
    mean = s1 * inv_h
    var = jnp.maximum(s2 * inv_h - mean * mean, 0.0)

    y = (e - mean) * jax.lax.rsqrt(var + EPS) * gamma_ref[...] + beta_ref[...]
    o_ref[...] = y.astype(o_ref.dtype)


# --------------------------------------------------------------------------- #
# Host-side glue: assemble the CLS <IMG..> SEP <IMG..> SEP ... layout.
# Returns (in compute_dtype):
#   x_full [bsz, seq, Din]  image features at image positions, 0 elsewhere
#   extras [bsz, seq, H]    word(CLS/SEP) + position + token-type + gated bias
# --------------------------------------------------------------------------- #
def _assemble(input_imgs, token_type_ids, cls_id, sep_id, params,
              inter_token_id=None, img_token_interval=1,
              compute_dtype=jnp.bfloat16):
    assert img_token_interval == 1, "only the default interval=1 is supported"
    if input_imgs.ndim == 3:
        input_imgs = input_imgs[:, None]
    bsz, num_images, length, din = input_imgs.shape

    b = params["img_b"]
    hidden = params["img_w"].shape[1]
    seq = num_images * length + (num_images - 1) * img_token_interval + 2
    cd = compute_dtype

    # image features at image positions, zeros at CLS/SEP positions
    imgs_c = input_imgs.astype(cd)
    x_full = jnp.concatenate(
        [imgs_c, jnp.zeros((bsz, num_images, 1, din), cd)], axis=2
    ).reshape(bsz, num_images * (length + 1), din)
    x_full = jnp.concatenate([jnp.zeros((bsz, 1, din), cd), x_full], axis=1)

    # per-position role masks over the CLS <IMG..> SEP ... layout
    pos = jnp.arange(seq)
    in_block = (pos - 1) % (length + 1)
    is_cls = pos == 0
    is_image = (pos >= 1) & (in_block < length)
    is_sep = (pos >= 1) & (in_block == length)

    word_emb = params["word_emb"].astype(cd)
    cls_e = word_emb[cls_id][:, None, :]                          # (bsz,1,H)
    if inter_token_id is None:
        inter_e = word_emb[sep_id][:, None, :]
    else:
        inter_e = word_emb[jnp.full_like(cls_id, inter_token_id)][:, None, :]

    tok_extra = jnp.where(
        is_cls[None, :, None], cls_e,
        jnp.where(is_sep[None, :, None], inter_e, jnp.zeros((), cd)))

    pos_e = params["pos_emb"][:seq].astype(cd)                    # (seq,H)
    type_e = params["type_emb"].astype(cd)[token_type_ids]        # (bsz,seq,H)
    # image-linear bias, gated to image positions, folded into extras
    bias_row = is_image[:, None].astype(cd) * b.astype(cd)[None, :]   # (seq,H)

    extras = tok_extra + (pos_e + bias_row)[None, :, :] + type_e
    return x_full, extras, seq


# --------------------------------------------------------------------------- #
# Public wrapper
# --------------------------------------------------------------------------- #
def image_bert_embeddings(input_imgs, token_type_ids, cls_id, sep_id, params,
                          inter_token_id=None, img_token_interval=1,
                          compute_dtype=jnp.bfloat16, out_dtype=jnp.bfloat16,
                          tile_m=512):
    """Pallas implementation of ImageBertEmbeddings.forward (eval mode).

    Note: out_dtype defaults to bfloat16 (halves the dominant HBM store);
    pass out_dtype=jnp.float32 for an f32-exact output stream.
    """
    x_full, extras, seq = _assemble(input_imgs, token_type_ids, cls_id, sep_id,
                                    params, inter_token_id, img_token_interval,
                                    compute_dtype)
    bsz, _, din = x_full.shape
    hidden = params["img_w"].shape[1]
    h_pad = _round_up(hidden, 128)                  # lane-dense output stores
    din_pad = _round_up(din, 128)                   # lane-dense x / full MXU K

    cbytes = jnp.dtype(compute_dtype).itemsize
    obytes = jnp.dtype(out_dtype).itemsize
    sub = 16 if cbytes == 2 else 8                  # packed-sublane alignment

    # ---- row tiling: flatten (bsz, seq) -> M rows, tile at TILE_M ----------
    m = bsz * seq
    min_grid = 2 if m > sub else 1                  # >=2 tiles -> both v7x TCs
    tm = _round_up(min(tile_m, _cdiv(m, min_grid)), sub)

    # ---- VMEM budget: shrink the tile until it fits this generation --------
    ceiling = _vmem_ceiling()

    def _need(t):
        return (2 * din_pad * h_pad * cbytes        # W (double-buffered)
                + 2 * t * din_pad * cbytes          # x tiles
                + 2 * t * h_pad * cbytes            # extras tiles
                + 2 * t * h_pad * obytes            # out tiles
                + 4 * h_pad * 4                     # gamma / beta
                + 6 * t * h_pad * 4)                # f32 in-kernel temporaries

    while _need(tm) + (8 << 20) > ceiling and tm > sub:
        tm = max(_round_up(tm // 2, sub), sub)
    grid_m = max(min_grid, _cdiv(m, tm))
    m_pad = grid_m * tm

    # ---- zero padding (rows to m_pad, K to din_pad, H to h_pad) ------------
    x_flat = jnp.pad(x_full.reshape(m, din),
                     ((0, m_pad - m), (0, din_pad - din)))
    e_flat = jnp.pad(extras.reshape(m, hidden),
                     ((0, m_pad - m), (0, h_pad - hidden)))
    W = jnp.pad(params["img_w"].astype(compute_dtype),
                ((0, din_pad - din), (0, h_pad - hidden)))
    gamma = jnp.pad(params["ln_gamma"].astype(jnp.float32),
                    (0, h_pad - hidden)).reshape(1, h_pad)
    beta = jnp.pad(params["ln_beta"].astype(jnp.float32),
                   (0, h_pad - hidden)).reshape(1, h_pad)

    vmem_need = _need(tm)
    vmem_limit = int(min(max(vmem_need + (8 << 20), 32 << 20), ceiling))

    cost = pl.CostEstimate(
        flops=2 * m_pad * din_pad * h_pad,
        transcendentals=m_pad,                       # one rsqrt per row
        bytes_accessed=(m_pad * din_pad * cbytes + din_pad * h_pad * cbytes
                        + m_pad * h_pad * cbytes + m_pad * h_pad * obytes),
    )

    kernel = functools.partial(image_bert_emb_kernel, h_real=hidden)

    out = pl.pallas_call(
        kernel,
        out_shape=jax.ShapeDtypeStruct((m_pad, h_pad), out_dtype),
        grid=(grid_m,),
        in_specs=[
            pl.BlockSpec((tm, din_pad), lambda i: (i, 0)),      # x rows
            pl.BlockSpec((din_pad, h_pad), lambda i: (0, 0)),   # W (resident)
            pl.BlockSpec((tm, h_pad), lambda i: (i, 0)),        # extras rows
            pl.BlockSpec((1, h_pad), lambda i: (0, 0)),         # gamma
            pl.BlockSpec((1, h_pad), lambda i: (0, 0)),         # beta
        ],
        out_specs=pl.BlockSpec((tm, h_pad), lambda i: (i, 0)),
        compiler_params=pltpu.CompilerParams(
            dimension_semantics=("parallel",),
            vmem_limit_bytes=vmem_limit),
        cost_estimate=cost,
    )(x_flat, W, e_flat, gamma, beta)

    # For standard BERT hiddens (multiple of 128) and aligned m this slice is
    # free; otherwise it is one extra (cheap, out_dtype-wide) copy.
    return out[:m, :hidden].reshape(bsz, seq, hidden)


# --------------------------------------------------------------------------- #
# References
# --------------------------------------------------------------------------- #
def reference_f32(input_imgs, token_type_ids, cls_id, sep_id, params):
    """Pure-JAX f32 mirror of the PyTorch forward (inter=None, interval=1)."""
    W, b = params["img_w"], params["img_b"]
    word_emb, pos_emb, type_emb = params["word_emb"], params["pos_emb"], params["type_emb"]
    gamma, beta = params["ln_gamma"], params["ln_beta"]
    bsz, num_images, length, _ = input_imgs.shape
    H = W.shape[1]
    seq = num_images * (length + 1) + 1
    cls_e = word_emb[cls_id][:, None, :]
    sep_e = word_emb[sep_id][:, None, :]
    proj = input_imgs @ W + b                                      # (bsz,ni,len,H)
    sep_rep = jnp.broadcast_to(sep_e[:, None, :, :], (bsz, num_images, 1, H))
    img_sep = jnp.concatenate([proj, sep_rep], axis=2).reshape(bsz, -1, H)
    tok = jnp.concatenate([cls_e, img_sep], axis=1)
    e = tok + pos_emb[:seq][None] + type_emb[token_type_ids]
    mean = e.mean(-1, keepdims=True)
    var = ((e - mean) ** 2).mean(-1, keepdims=True)
    return (e - mean) * jax.lax.rsqrt(var + EPS) * gamma + beta


def reference_kernel_precision(input_imgs, token_type_ids, cls_id, sep_id,
                               params, compute_dtype=jnp.bfloat16):
    """Same math as the kernel (compute_dtype inputs, f32 accumulate + f32 LN)."""
    x_full, extras, seq = _assemble(input_imgs, token_type_ids, cls_id, sep_id,
                                    params, compute_dtype=compute_dtype)
    bsz, _, din = x_full.shape
    hidden = params["img_w"].shape[1]
    Wc = params["img_w"].astype(compute_dtype)
    proj = jnp.dot(x_full.reshape(-1, din), Wc,
                   preferred_element_type=jnp.float32)
    e = proj + extras.reshape(-1, hidden).astype(jnp.float32)
    mean = e.mean(-1, keepdims=True)
    c = e - mean
    var = (c * c).mean(-1, keepdims=True)
    y = c * jax.lax.rsqrt(var + EPS) * params["ln_gamma"] + params["ln_beta"]
    return y.reshape(bsz, seq, hidden)


# --------------------------------------------------------------------------- #
if __name__ == "__main__":
    # small, forward-consistent shapes
    bsz, num_images, length = 2, 2, 7
    img_hidden, hidden = 64, 32
    vocab, max_pos, n_types = 30, 64, 2
    seq = num_images * (length + 1) + 1  # 17

    key = jax.random.PRNGKey(0)
    ks = jax.random.split(key, 8)
    params = {
        "img_w": jax.random.normal(ks[0], (img_hidden, hidden), jnp.float32) * 0.02,
        "img_b": jax.random.normal(ks[1], (hidden,), jnp.float32) * 0.02,
        "word_emb": jax.random.normal(ks[2], (vocab, hidden), jnp.float32) * 0.02,
        "pos_emb": jax.random.normal(ks[3], (max_pos, hidden), jnp.float32) * 0.02,
        "type_emb": jax.random.normal(ks[4], (n_types, hidden), jnp.float32) * 0.02,
        "ln_gamma": jnp.ones((hidden,), jnp.float32),
        "ln_beta": jnp.zeros((hidden,), jnp.float32),
    }

    input_imgs = jax.random.normal(ks[5], (bsz, num_images, length, img_hidden),
                                   jnp.float32)
    token_type_ids = jax.random.randint(ks[6], (bsz, seq), 0, n_types, jnp.int32)
    cls_id = jnp.full((bsz,), 1, jnp.int32)
    sep_id = jnp.full((bsz,), 2, jnp.int32)

    # default fast path: bf16 inputs, bf16 output
    out = image_bert_embeddings(input_imgs, token_type_ids, cls_id, sep_id, params)
    out = jax.block_until_ready(out)
    assert out.shape == (bsz, seq, hidden)
    out_f = out.astype(jnp.float32)

    # 1) tight check vs a reference using the kernel's exact precision recipe
    #    (bf16 output rounding dominates the tolerance)
    ref_mixed = reference_kernel_precision(input_imgs, token_type_ids, cls_id,
                                           sep_id, params)
    assert jnp.allclose(out_f, ref_mixed, atol=3e-2, rtol=3e-2), \
        "mismatch vs kernel-precision reference"

    # 2) module-semantics check (pure f32); looser tol accounts for bf16 streams
    ref = reference_f32(input_imgs, token_type_ids, cls_id, sep_id, params)
    assert jnp.allclose(out_f, ref, atol=6e-2, rtol=6e-2), \
        "mismatch vs f32 module reference (bf16 tolerance)"

    # 3) f32 compute + f32 output path matches the module reference tightly
    out_f32 = image_bert_embeddings(input_imgs, token_type_ids, cls_id, sep_id,
                                    params, compute_dtype=jnp.float32,
                                    out_dtype=jnp.float32)
    out_f32 = jax.block_until_ready(out_f32)
    assert jnp.allclose(out_f32, ref, atol=1e-3, rtol=1e-3), \
        "mismatch vs f32 module reference (f32 path)"

    print("KERNEL_OK")
</pallas_src>

<mosaic_0001>
module attributes {stable_mosaic.version = 11 : i64} {
  func.func @image_bert_emb_kernel(%arg0: i32, %arg1: memref<32x128xbf16, #tpu.memory_space<vmem>>, %arg2: memref<128x128xbf16, #tpu.memory_space<vmem>>, %arg3: memref<32x128xbf16, #tpu.memory_space<vmem>>, %arg4: memref<1x128xf32, #tpu.memory_space<vmem>>, %arg5: memref<1x128xf32, #tpu.memory_space<vmem>>, %arg6: memref<32x128xbf16, #tpu.memory_space<vmem>>) attributes {dimension_semantics = [#tpu.dimension_semantics<parallel>], iteration_bounds = array<i64: 2>, scalar_prefetch = 0 : i64, scratch_operands = 0 : i64, tpu.core_type = #tpu.core_type<tc>, window_params = [{transform_indices = @transform_0, window_bounds = array<i64: 32, 128>}, {pipeline_mode = #tpu.pipeline_mode<synchronous>, transform_indices = @transform_1, window_bounds = array<i64: 128, 128>}, {transform_indices = @transform_2, window_bounds = array<i64: 32, 128>}, {pipeline_mode = #tpu.pipeline_mode<synchronous>, transform_indices = @transform_3, window_bounds = array<i64: 1, 128>}, {pipeline_mode = #tpu.pipeline_mode<synchronous>, transform_indices = @transform_4, window_bounds = array<i64: 1, 128>}, {transform_indices = @transform_5, window_bounds = array<i64: 32, 128>}]} {
    %c0 = arith.constant 0 : index
    %c0_0 = arith.constant 0 : index
    %0 = vector.load %arg1[%c0, %c0_0] : memref<32x128xbf16, #tpu.memory_space<vmem>>, vector<32x128xbf16>
    %c0_1 = arith.constant 0 : index
    %c0_2 = arith.constant 0 : index
    %1 = vector.load %arg2[%c0_1, %c0_2] : memref<128x128xbf16, #tpu.memory_space<vmem>>, vector<128x128xbf16>
    %cst = arith.constant dense<0.000000e+00> : vector<32x128xf32>
    %2 = tpu.matmul %0, %1, %cst {dimension_numbers = #tpu.dot_dimension_numbers<[1], [0], [0], [1], [0, 0, 1, 1], [], []>} : vector<32x128xbf16>, vector<128x128xbf16>, vector<32x128xf32> -> vector<32x128xf32>
    %c0_3 = arith.constant 0 : index
    %c0_4 = arith.constant 0 : index
    %3 = vector.load %arg3[%c0_3, %c0_4] : memref<32x128xbf16, #tpu.memory_space<vmem>>, vector<32x128xbf16>
    %4 = arith.extf %3 : vector<32x128xbf16> to vector<32x128xf32>
    %5 = arith.addf %2, %4 : vector<32x128xf32>
    %cst_5 = arith.constant dense<0.000000e+00> : vector<32xf32>
    %6 = vector.multi_reduction <add>, %5, %cst_5 [1] : vector<32x128xf32> to vector<32xf32>
    %7 = vector.shape_cast %6 : vector<32xf32> to vector<32x1xf32>
    %8 = arith.mulf %5, %5 : vector<32x128xf32>
    %cst_6 = arith.constant dense<0.000000e+00> : vector<32xf32>
    %9 = vector.multi_reduction <add>, %8, %cst_6 [1] : vector<32x128xf32> to vector<32xf32>
    %10 = vector.shape_cast %9 : vector<32xf32> to vector<32x1xf32>
    %cst_7 = arith.constant 3.125000e-02 : f32
    %11 = vector.broadcast %cst_7 : f32 to vector<32x1xf32>
    %12 = arith.mulf %7, %11 : vector<32x1xf32>
    %cst_8 = arith.constant 3.125000e-02 : f32
    %13 = vector.broadcast %cst_8 : f32 to vector<32x1xf32>
    %14 = arith.mulf %10, %13 : vector<32x1xf32>
    %15 = arith.mulf %12, %12 : vector<32x1xf32>
    %16 = arith.subf %14, %15 : vector<32x1xf32>
    %cst_9 = arith.constant 0.000000e+00 : f32
    %17 = vector.broadcast %cst_9 : f32 to vector<32x1xf32>
    %18 = arith.maximumf %16, %17 : vector<32x1xf32>
    %19 = vector.broadcast %12 : vector<32x1xf32> to vector<32x128xf32>
    %20 = arith.subf %5, %19 : vector<32x128xf32>
    %cst_10 = arith.constant 9.99999996E-13 : f32
    %21 = vector.broadcast %cst_10 : f32 to vector<32x1xf32>
    %22 = arith.addf %18, %21 : vector<32x1xf32>
    %23 = math.rsqrt %22 : vector<32x1xf32>
    %24 = vector.broadcast %23 : vector<32x1xf32> to vector<32x128xf32>
    %25 = arith.mulf %20, %24 : vector<32x128xf32>
    %c0_11 = arith.constant 0 : index
    %c0_12 = arith.constant 0 : index
    %26 = vector.load %arg4[%c0_11, %c0_12] : memref<1x128xf32, #tpu.memory_space<vmem>>, vector<1x128xf32>
    %27 = vector.broadcast %26 : vector<1x128xf32> to vector<32x128xf32>
    %28 = arith.mulf %25, %27 : vector<32x128xf32>
    %c0_13 = arith.constant 0 : index
    %c0_14 = arith.constant 0 : index
    %29 = vector.load %arg5[%c0_13, %c0_14] : memref<1x128xf32, #tpu.memory_space<vmem>>, vector<1x128xf32>
    %30 = vector.broadcast %29 : vector<1x128xf32> to vector<32x128xf32>
    %31 = arith.addf %28, %30 : vector<32x128xf32>
    %32 = arith.truncf %31 : vector<32x128xf32> to vector<32x128xbf16>
    %c0_15 = arith.constant 0 : index
    %c0_16 = arith.constant 0 : index
    %33 = vector.load %arg6[%c0_15, %c0_16] : memref<32x128xbf16, #tpu.memory_space<vmem>>, vector<32x128xbf16>
    tpu.vector_store %arg6[%c0_15, %c0_16], %32 {strides = array<i32>} : memref<32x128xbf16, #tpu.memory_space<vmem>>, vector<32x128xbf16>,
    return
  }
  func.func @transform_0(%arg0: i32) -> (i32, i32) {
    %c0_i32 = arith.constant 0 : i32
    %c0_i32_0 = arith.constant 0 : i32
    return %arg0, %c0_i32 : i32, i32
  }
  func.func @transform_1(%arg0: i32) -> (i32, i32) {
    %c0_i32 = arith.constant 0 : i32
    %c0_i32_0 = arith.constant 0 : i32
    %c0_i32_1 = arith.constant 0 : i32
    return %c0_i32, %c0_i32_0 : i32, i32
  }
  func.func @transform_2(%arg0: i32) -> (i32, i32) {
    %c0_i32 = arith.constant 0 : i32
    %c0_i32_0 = arith.constant 0 : i32
    return %arg0, %c0_i32 : i32, i32
  }
  func.func @transform_3(%arg0: i32) -> (i32, i32) {
    %c0_i32 = arith.constant 0 : i32
    %c0_i32_0 = arith.constant 0 : i32
    %c0_i32_1 = arith.constant 0 : i32
    return %c0_i32, %c0_i32_0 : i32, i32
  }
  func.func @transform_4(%arg0: i32) -> (i32, i32) {
    %c0_i32 = arith.constant 0 : i32
    %c0_i32_0 = arith.constant 0 : i32
    %c0_i32_1 = arith.constant 0 : i32
    return %c0_i32, %c0_i32_0 : i32, i32
  }
  func.func @transform_5(%arg0: i32) -> (i32, i32) {
    %c0_i32 = arith.constant 0 : i32
    %c0_i32_0 = arith.constant 0 : i32
    return %arg0, %c0_i32 : i32, i32
  }
}

</mosaic_0001>

<llo_original>
// kernel: tpu_custom_call.1
$region0: #{tpu_custom_call.1}
  #allocation0 [shape = 'u32[]', space=smem, size = 0x4, offset = 0x4, fixed_abs, tag = 'smem constant byte address 0x4 - core index']
  #allocation1 [shape = 'u32[144,128]{1,0:T(1,128)}', space=vmem, size = 0x12000, scoped, tag = 'internal scratch']
  %s0 = inlined_call_operand.hbm [shape: bf16[64,128], index: 0, kind: input, shape index: {}]
  %s1 = inlined_call_operand.hbm [shape: bf16[128,128], index: 1, kind: input, shape index: {}]
  %s2 = inlined_call_operand.hbm [shape: bf16[64,128], index: 2, kind: input, shape index: {}]
  %s3 = inlined_call_operand.vmem [shape: f32[1,128], index: 3, kind: input, shape index: {}]
  %s4 = inlined_call_operand.vmem [shape: f32[1,128], index: 4, kind: input, shape index: {}]
  %s5 = inlined_call_operand.hbm [shape: bf16[64,128], index: 5, kind: output, shape index: {}]
  %s6 = sld [smem:[#allocation0]]
  $region65: #{tpu_custom_call.1} parent=0
    _
  %s8 = ssub.s32 1, %s6
  %s9 = scalar_select 0, %s8, %s6
  $region1: #{tpu_custom_call.1} parent=0
    #allocation2 [shape = 'u8[16384]{0}', space=vmem, size = 0x4000, scoped, tag = 'input window, operand 0']
    #allocation3 [shape = 's32[2]{0}', space=sflag, size = 0x8, scoped, tag = 'scoped memory for tpu_custom_call.1']
    #allocation4 [shape = 's32[2]{0}', space=sflag, size = 0x8, scoped, tag = 'scoped memory for tpu_custom_call.1']
    #allocation5 [shape = 'u8[32768]{0}', space=vmem, size = 0x8000, scoped, tag = 'input window, operand 1, single buffered']
    #allocation6 [shape = 's32[1]{0}', space=sflag, size = 0x4, scoped, tag = 'scoped memory for tpu_custom_call.1']
    #allocation7 [shape = 'u8[16384]{0}', space=vmem, size = 0x4000, scoped, tag = 'input window, operand 2']
    #allocation8 [shape = 'u8[16384]{0}', space=vmem, size = 0x4000, scoped, tag = 'output window, operand 0']
    %10 = vsyncpa [#allocation3], 0
    %s11 = scalar_lea.sflag [#allocation3], 1
    %12 = vsyncpa %s11, 0
    %13 = vsyncpa [#allocation6], 0
    %14 = vsyncpa [#allocation4], 0
    %s15 = scalar_lea.sflag [#allocation4], 1
    %16 = vsyncpa %s15, 0
    loop: start=0, step=1, limit=4
    $region2: #{tpu_custom_call.1} parent=1 // loop_pre_header
      _
    $region3: #{tpu_custom_call.1} parent=1 // loop_header
      %s18 = sphi 0, %s22
      %p19 = scmp.ge.s32.totalorder %s18, 4
      %s28 = sphi 0, %s30
      %s31 = sphi 0, %s28
      %s32 = sphi 0, %s31
      %s48 = sphi 0, %s32
      %s52 = sphi 0, %s52
      %s54 = sphi 0, %s52
      %s55 = sphi 0, %s54
      %s69 = sphi 0, %s55
      %s75 = sphi 0, %s77
      %s78 = sphi 0, %s75
      %s79 = sphi 0, %s78
      %s95 = sphi 0, %s79
      %s99 = sphi 0, %s99
      %s101 = sphi 0, %s99
      %s102 = sphi 0, %s101
      %s116 = sphi 0, %s102
      %s120 = sphi 0, %s120
      %s122 = sphi 0, %s120
      %s123 = sphi 0, %s122
      %s137 = sphi 0, %s123
      %s143 = sphi 0, %s145
      %s146 = sphi 0, %s143
      %s147 = sphi 0, %s146
      %s163 = sphi 0, %s147
    $region4: #{tpu_custom_call.1} parent=1 // loop_header_branch
      %21 = sbr.rel (%p19) target = $region8
    $region5: #{tpu_custom_call.1} parent=1 // loop_body
      %s23 = ssub.s32 %s18, 1
      %s24 = ssub.s32 %s18, 2
      %s25 = sadd.s32 %s18, 1
      %s26 = ssub.s32 %s18, %s25
      %p27 = scmp.eq.s32.totalorder %s26, 0
      %s29 = sadd.s32 %s28, 1
      %s30 = scalar_select %p27, %s28, %s29
      %p33 = pneg %p27
      %p34 = scmp.eq.s32.totalorder %s18, 1
      %p35 = por %p33, %p34
      %p36 = scmp.ne.s32.totalorder %s28, %s31
      %p37 = scmp.eq.s32.totalorder %s18, 0
      %p38 = por %p36, %p37
      %p39 = scmp.ne.s32.totalorder %s28, %s31
      %p40 = scmp.eq.s32.totalorder %s23, 1
      %p41 = por %p39, %p40
      %p42 = scmp.ne.s32.totalorder %s31, %s32
      %p43 = scmp.eq.s32.totalorder %s23, 0
      %p44 = por %p42, %p43
      %p45 = scmp.ne.s32.totalorder %s31, %s32
      %p46 = scmp.eq.s32.totalorder %s24, 1
      %p47 = por %p45, %p46
      %p49 = scmp.ne.s32.totalorder %s32, %s48
      %p50 = scmp.eq.s32.totalorder %s24, 0
      %p51 = por %p49, %p50
      %s53 = sadd.s32 %s52, 1
      %p56 = scmp.eq.s32.totalorder %s18, 1
      %p57 = scmp.ne.s32.totalorder %s52, %s54
      %p58 = scmp.eq.s32.totalorder %s18, 0
      %p59 = por %p57, %p58
      %p60 = scmp.ne.s32.totalorder %s52, %s54
      %p61 = scmp.eq.s32.totalorder %s23, 1
      %p62 = por %p60, %p61
      %p63 = scmp.ne.s32.totalorder %s54, %s55
      %p64 = scmp.eq.s32.totalorder %s23, 0
      %p65 = por %p63, %p64
      %p66 = scmp.ne.s32.totalorder %s54, %s55
      %p67 = scmp.eq.s32.totalorder %s24, 1
      %p68 = por %p66, %p67
      %p70 = scmp.ne.s32.totalorder %s55, %s69
      %p71 = scmp.eq.s32.totalorder %s24, 0
      %p72 = por %p70, %p71
      %s73 = ssub.s32 %s18, %s25
      %p74 = scmp.eq.s32.totalorder %s73, 0
      %s76 = sadd.s32 %s75, 1
      %s77 = scalar_select %p74, %s75, %s76
      %p80 = pneg %p74
      %p81 = scmp.eq.s32.totalorder %s18, 1
      %p82 = por %p80, %p81
      %p83 = scmp.ne.s32.totalorder %s75, %s78
      %p84 = scmp.eq.s32.totalorder %s18, 0
      %p85 = por %p83, %p84
      %p86 = scmp.ne.s32.totalorder %s75, %s78
      %p87 = scmp.eq.s32.totalorder %s23, 1
      %p88 = por %p86, %p87
      %p89 = scmp.ne.s32.totalorder %s78, %s79
      %p90 = scmp.eq.s32.totalorder %s23, 0
      %p91 = por %p89, %p90
      %p92 = scmp.ne.s32.totalorder %s78, %s79
      %p93 = scmp.eq.s32.totalorder %s24, 1
      %p94 = por %p92, %p93
      %p96 = scmp.ne.s32.totalorder %s79, %s95
      %p97 = scmp.eq.s32.totalorder %s24, 0
      %p98 = por %p96, %p97
      %s100 = sadd.s32 %s99, 1
      %p103 = scmp.eq.s32.totalorder %s18, 1
      %p104 = scmp.ne.s32.totalorder %s99, %s101
      %p105 = scmp.eq.s32.totalorder %s18, 0
      %p106 = por %p104, %p105
      %p107 = scmp.ne.s32.totalorder %s99, %s101
      %p108 = scmp.eq.s32.totalorder %s23, 1
      %p109 = por %p107, %p108
      %p110 = scmp.ne.s32.totalorder %s101, %s102
      %p111 = scmp.eq.s32.totalorder %s23, 0
      %p112 = por %p110, %p111
      %p113 = scmp.ne.s32.totalorder %s101, %s102
      %p114 = scmp.eq.s32.totalorder %s24, 1
      %p115 = por %p113, %p114
      %p117 = scmp.ne.s32.totalorder %s102, %s116
      %p118 = scmp.eq.s32.totalorder %s24, 0
      %p119 = por %p117, %p118
      %s121 = sadd.s32 %s120, 1
      %p124 = scmp.eq.s32.totalorder %s18, 1
      %p125 = scmp.ne.s32.totalorder %s120, %s122
      %p126 = scmp.eq.s32.totalorder %s18, 0
      %p127 = por %p125, %p126
      %p128 = scmp.ne.s32.totalorder %s120, %s122
      %p129 = scmp.eq.s32.totalorder %s23, 1
      %p130 = por %p128, %p129
      %p131 = scmp.ne.s32.totalorder %s122, %s123
      %p132 = scmp.eq.s32.totalorder %s23, 0
      %p133 = por %p131, %p132
      %p134 = scmp.ne.s32.totalorder %s122, %s123
      %p135 = scmp.eq.s32.totalorder %s24, 1
      %p136 = por %p134, %p135
      %p138 = scmp.ne.s32.totalorder %s123, %s137
      %p139 = scmp.eq.s32.totalorder %s24, 0
      %p140 = por %p138, %p139
      %s141 = ssub.s32 %s18, %s25
      %p142 = scmp.eq.s32.totalorder %s141, 0
      %s144 = sadd.s32 %s143, 1
      %s145 = scalar_select %p142, %s143, %s144
      %p148 = pneg %p142
      %p149 = scmp.eq.s32.totalorder %s18, 1
      %p150 = por %p148, %p149
      %p151 = scmp.ne.s32.totalorder %s143, %s146
      %p152 = scmp.eq.s32.totalorder %s18, 0
      %p153 = por %p151, %p152
      %p154 = scmp.ne.s32.totalorder %s143, %s146
      %p155 = scmp.eq.s32.totalorder %s23, 1
      %p156 = por %p154, %p155
      %p157 = scmp.ne.s32.totalorder %s146, %s147
      %p158 = scmp.eq.s32.totalorder %s23, 0
      %p159 = por %p157, %p158
      %p160 = scmp.ne.s32.totalorder %s146, %s147
      %p161 = scmp.eq.s32.totalorder %s24, 1
      %p162 = por %p160, %p161
      %p164 = scmp.ne.s32.totalorder %s147, %s163
      %p165 = scmp.eq.s32.totalorder %s24, 0
      %p166 = por %p164, %p165
      %p167 = scmp.le.s32.totalorder 1, %s18
      %p168 = scmp.lt.s32.totalorder %s18, 3
      %p169 = pnand %p167, %p168
      %p170 = pneg %p169
      // Predicated region
      $region9: #{tpu_custom_call.1} parent=5 // pred_check
        _
      $region10: #{tpu_custom_call.1} parent=5 // pred_check_branch
        %172 = sbr.rel (%p169) target = $region12
      $region11: #{tpu_custom_call.1} parent=5 // pred_region
        %s173 = ssub.s32 %s18, 1
        // Predicated region
        $region13: #{tpu_custom_call.1} parent=11 // pred_check
          %p174 = pneg %p65
        $region14: #{tpu_custom_call.1} parent=11 // pred_check_branch
          %176 = sbr.rel (%p174) target = $region16
        $region15: #{tpu_custom_call.1} parent=11 // pred_region
          %s178 = ssub.s32 1024, 1024
          %179 = vsyncadd [#allocation6], %s178
          %s180 = sshll.u32 [#allocation5], 4
          %s181 = int_to_ptr.vmem [resolvable:$true] %s180
          %186 = dma.hbm_to_vmem [thread:$0]  %s1, 1024, %s181, [#allocation6], 64, 64, 4
        $region16: #{tpu_custom_call.1} parent=11 // pred_fallthru
          _
        // Predicated region
        $region17: #{tpu_custom_call.1} parent=11 // pred_check
          %p187 = pneg %p112
        $region18: #{tpu_custom_call.1} parent=11 // pred_check_branch
          %189 = sbr.rel (%p187) target = $region20
        $region19: #{tpu_custom_call.1} parent=11 // pred_region
          _
        $region20: #{tpu_custom_call.1} parent=11 // pred_fallthru
          _
        // Predicated region
        $region21: #{tpu_custom_call.1} parent=11 // pred_check
          %p190 = pneg %p133
        $region22: #{tpu_custom_call.1} parent=11 // pred_check_branch
          %192 = sbr.rel (%p190) target = $region24
        $region23: #{tpu_custom_call.1} parent=11 // pred_region
          _
        $region24: #{tpu_custom_call.1} parent=11 // pred_fallthru
          _
      $region12: #{tpu_custom_call.1} parent=5 // pred_fallthru
        _
      %p193 = scmp.lt.s32.totalorder %s18, 2
      // Predicated region
      $region25: #{tpu_custom_call.1} parent=5 // pred_check
        %p194 = pneg %p193
      $region26: #{tpu_custom_call.1} parent=5 // pred_check_branch
        %196 = sbr.rel (%p194) target = $region28
      $region27: #{tpu_custom_call.1} parent=5 // pred_region
        // Predicated region
        $region29: #{tpu_custom_call.1} parent=27 // pred_check
          %p197 = pneg %p38
        $region30: #{tpu_custom_call.1} parent=27 // pred_check_branch
          %199 = sbr.rel (%p197) target = $region32
        $region31: #{tpu_custom_call.1} parent=27 // pred_region
          %s200 = sand.u32 %s18, 1
          %s201 = scalar_lea.sflag [#allocation3], %s200
          %s202 = sand.u32 %s28, 1
          %s203 = smul.addr %s202, 16
          %s204 = scalar_lea.vmem [#allocation2], %s203
          %s205 = smul.u32 4, %s18
          %s207 = ssub.s32 256, 256
          %208 = vsyncadd %s201, %s207
          %s209 = smul.addr %s205, 64
          %s210 = scalar_lea.hbm %s0, %s209
          %s211 = sshll.u32 %s204, 4
          %s212 = int_to_ptr.vmem [resolvable:$true] %s211
          %217 = dma.hbm_to_vmem [thread:$0]  %s210, 256, %s212, %s201, 64, 64, 4
        $region32: #{tpu_custom_call.1} parent=27 // pred_fallthru
          _
        // Predicated region
        $region33: #{tpu_custom_call.1} parent=27 // pred_check
          %p218 = pneg %p85
        $region34: #{tpu_custom_call.1} parent=27 // pred_check_branch
          %220 = sbr.rel (%p218) target = $region36
        $region35: #{tpu_custom_call.1} parent=27 // pred_region
          %s221 = sand.u32 %s18, 1
          %s222 = scalar_lea.sflag [#allocation3], %s221
          %s223 = sand.u32 %s75, 1
          %s224 = smul.addr %s223, 16
          %s225 = scalar_lea.vmem [#allocation7], %s224
          %s226 = smul.u32 4, %s18
          %s228 = ssub.s32 256, 256
          %229 = vsyncadd %s222, %s228
          %s230 = smul.addr %s226, 64
          %s231 = scalar_lea.hbm %s2, %s230
          %s232 = sshll.u32 %s225, 4
          %s233 = int_to_ptr.vmem [resolvable:$true] %s232
          %238 = dma.hbm_to_vmem [thread:$0]  %s231, 256, %s233, %s222, 64, 64, 4
        $region36: #{tpu_custom_call.1} parent=27 // pred_fallthru
          _
      $region28: #{tpu_custom_call.1} parent=5 // pred_fallthru
        _
      %p239 = scmp.le.s32.totalorder 1, %s18
      %p240 = scmp.lt.s32.totalorder %s18, 3
      %p241 = pnand %p239, %p240
      %p242 = pneg %p241
      // Predicated region
      $region37: #{tpu_custom_call.1} parent=5 // pred_check
        _
      $region38: #{tpu_custom_call.1} parent=5 // pred_check_branch
        %244 = sbr.rel (%p241) target = $region40
      $region39: #{tpu_custom_call.1} parent=5 // pred_region
        %s245 = ssub.s32 %s18, 1
        %s246 = sand.u32 %s23, 1
        %s247 = scalar_lea.sflag [#allocation3], %s246
        %s248 = sand.u32 %s31, 1
        %s249 = smul.addr %s248, 16
        %s250 = scalar_lea.vmem [#allocation2], %s249
        // Predicated region
        $region41: #{tpu_custom_call.1} parent=39 // pred_check
          %p251 = pneg %p44
        $region42: #{tpu_custom_call.1} parent=39 // pred_check_branch
          %253 = sbr.rel (%p251) target = $region44
        $region43: #{tpu_custom_call.1} parent=39 // pred_region
          %254 = dma.done %s247, 256
        $region44: #{tpu_custom_call.1} parent=39 // pred_fallthru
          _
        // Predicated region
        $region45: #{tpu_custom_call.1} parent=39 // pred_check
          %p255 = pneg %p65
        $region46: #{tpu_custom_call.1} parent=39 // pred_check_branch
          %257 = sbr.rel (%p255) target = $region48
        $region47: #{tpu_custom_call.1} parent=39 // pred_region
          %258 = dma.done [#allocation6], 1024
        $region48: #{tpu_custom_call.1} parent=39 // pred_fallthru
          _
        %s259 = sand.u32 %s23, 1
        %s260 = scalar_lea.sflag [#allocation3], %s259
        %s261 = sand.u32 %s78, 1
        %s262 = smul.addr %s261, 16
        %s263 = scalar_lea.vmem [#allocation7], %s262
        // Predicated region
        $region49: #{tpu_custom_call.1} parent=39 // pred_check
          %p264 = pneg %p91
        $region50: #{tpu_custom_call.1} parent=39 // pred_check_branch
          %266 = sbr.rel (%p264) target = $region52
        $region51: #{tpu_custom_call.1} parent=39 // pred_region
          %267 = dma.done %s260, 256
        $region52: #{tpu_custom_call.1} parent=39 // pred_fallthru
          _
        %s268 = sand.u32 %s23, 1
        %s269 = scalar_lea.sflag [#allocation3], %s268
        %s270 = sand.u32 %s31, 1
        %s271 = smul.addr %s270, 16
        %s272 = scalar_lea.vmem [#allocation2], %s271
        %p273 = pneg %p44
        %p274 = pneg %p41
        %p275 = pneg %p65
        %p276 = pneg %p62
        %s277 = sand.u32 %s23, 1
        %s278 = scalar_lea.sflag [#allocation3], %s277
        %s279 = sand.u32 %s78, 1
        %s280 = smul.addr %s279, 16
        %s281 = scalar_lea.vmem [#allocation7], %s280
        %p282 = pneg %p91
        %p283 = pneg %p88
        %p284 = pneg %p112
        %p285 = pneg %p109
        %p286 = pneg %p133
        %p287 = pneg %p130
        %p288 = pneg %p159
        %p289 = pneg %p156
        %s290 = sand.u32 %s146, 1
        %s291 = scalar_lea.sflag [#allocation4], %s290
        %s292 = sand.u32 %s146, 1
        %s293 = smul.addr %s292, 16
        %s294 = scalar_lea.vmem [#allocation8], %s293
        %s295 = smul.u32 4, %s23
        %s296 = smul.u32 4, %s23
        %s297 = smul.u32 4, %s23
        %v299 = vld [vmem:[%s250] sm:$0xf]
        %v300 = vld [vmem:[%s250 + $0x4] sm:$0xf]
        %v301 = vld [vmem:[%s250 + $0x8] sm:$0xf]
        %v302 = vld [vmem:[%s250 + $0xc] sm:$0xf]
        %v303 = vld [vmem:[#allocation5] sm:$0xf]
        %v304 = vld [vmem:[#allocation5 + $0x4] sm:$0xf]
        %v305 = vld [vmem:[#allocation5 + $0x8] sm:$0xf]
        %v306 = vld [vmem:[#allocation5 + $0xc] sm:$0xf]
        %v307 = vld [vmem:[#allocation5 + $0x10] sm:$0xf]
        %v308 = vld [vmem:[#allocation5 + $0x14] sm:$0xf]
        %v309 = vld [vmem:[#allocation5 + $0x18] sm:$0xf]
        %v310 = vld [vmem:[#allocation5 + $0x1c] sm:$0xf]
        %v311 = vld [vmem:[#allocation5 + $0x20] sm:$0xf]
        %v312 = vld [vmem:[#allocation5 + $0x24] sm:$0xf]
        %v313 = vld [vmem:[#allocation5 + $0x28] sm:$0xf]
        %v314 = vld [vmem:[#allocation5 + $0x2c] sm:$0xf]
        %v315 = vld [vmem:[#allocation5 + $0x30] sm:$0xf]
        %v316 = vld [vmem:[#allocation5 + $0x34] sm:$0xf]
        %v317 = vld [vmem:[#allocation5 + $0x38] sm:$0xf]
        %v318 = vld [vmem:[#allocation5 + $0x3c] sm:$0xf]
        %v319 = vld [vmem:[%s263] sm:$0xf]
        %v320 = vld [vmem:[%s263 + $0x4] sm:$0xf]
        %v321 = vld [vmem:[%s263 + $0x8] sm:$0xf]
        %v322 = vld [vmem:[%s263 + $0xc] sm:$0xf]
        %v323 = vunpack.c.l.bf16 %v319
        %v324 = vunpack.c.l.bf16 %v320
        %v325 = vunpack.c.l.bf16 %v321
        %v326 = vunpack.c.l.bf16 %v322
        %v331 = vunpack.c.l.b16 %v299
        %v332 = vunpack.c.l.b16 %v300
        %v333 = vunpack.c.l.b16 %v301
        %v334 = vunpack.c.l.b16 %v302
        %v335 = vpack.c.b16 %v332, %v331
        %v336 = vpack.c.b16 %v334, %v333
        %v355 = vunpack.c.l.b16 %v303
        %v356 = vunpack.c.l.b16 %v304
        %v357 = vunpack.c.l.b16 %v305
        %v358 = vunpack.c.l.b16 %v306
        %v359 = vunpack.c.l.b16 %v307
        %v360 = vunpack.c.l.b16 %v308
        %v361 = vunpack.c.l.b16 %v309
        %v362 = vunpack.c.l.b16 %v310
        %v363 = vunpack.c.l.b16 %v311
        %v364 = vunpack.c.l.b16 %v312
        %v365 = vunpack.c.l.b16 %v313
        %v366 = vunpack.c.l.b16 %v314
        %v367 = vunpack.c.l.b16 %v315
        %v368 = vunpack.c.l.b16 %v316
        %v369 = vunpack.c.l.b16 %v317
        %v370 = vunpack.c.l.b16 %v318
        %v371 = vpack.c.b16 %v356, %v355
        %v372 = vpack.c.b16 %v358, %v357
        %v373 = vpack.c.b16 %v360, %v359
        %v374 = vpack.c.b16 %v362, %v361
        %v375 = vpack.c.b16 %v364, %v363
        %v376 = vpack.c.b16 %v366, %v365
        %v377 = vpack.c.b16 %v368, %v367
        %v378 = vpack.c.b16 %v370, %v369
        %387 = vmatprep.subr.bf16.mxu0 0
        %388 = vmatpush1.bf16.msra.mxu0 %v371
        %389 = vmatprep.subr.bf16.mxu0 0
        %390 = vmatpush1.bf16.msra.mxu0 %v372
        %391 = vmatprep.subr.bf16.mxu0 0
        %392 = vmatpush1.bf16.msra.mxu0 %v373
        %393 = vmatprep.subr.bf16.mxu0 0
        %394 = vmatpush1.bf16.msra.mxu0 %v374
        %395 = vmatprep.subr.bf16.mxu0 0
        %396 = vmatpush1.bf16.msra.mxu0 %v375
        %397 = vmatprep.subr.bf16.mxu0 0
        %398 = vmatpush1.bf16.msra.mxu0 %v376
        %399 = vmatprep.subr.bf16.mxu0 0
        %400 = vmatpush1.bf16.msra.mxu0 %v377
        %401 = vmatprep.subr.bf16.mxu0 0
        %402 = vmatpush1.bf16.msra.mxu0 %v378
        %403 = vmatprep.subr.bf16.mxu0 0
        %404 = vmatpush1.bf16.msra.mxu0 0
        %405 = vmatprep.subr.bf16.mxu0 0
        %406 = vmatpush1.bf16.msra.mxu0 0
        %407 = vmatprep.subr.bf16.mxu0 0
        %408 = vmatpush1.bf16.msra.mxu0 0
        %409 = vmatprep.subr.bf16.mxu0 0
        %410 = vmatpush1.bf16.msra.mxu0 0
        %411 = vmatprep.subr.bf16.mxu0 0
        %412 = vmatpush1.bf16.msra.mxu0 0
        %413 = vmatprep.subr.bf16.mxu0 0
        %414 = vmatpush1.bf16.msra.mxu0 0
        %415 = vmatprep.subr.bf16.mxu0 0
        %416 = vmatpush1.bf16.msra.mxu0 0
        %417 = vmatprep.subr.bf16.mxu0 0
        %418 = vmatpush1.bf16.msra.mxu0 0
        %419 = vmatprep.mubr.bf16.mxu0 0
        %420 = vmatmul.mubr.bf16.gmra.mrb[0].mxu0 %v335
        %v421 = vpop.f32.mrb[0].mxu0
        %v422 = vadd.f32 %v323, %v421
        %v423 = vpop.f32.mrb[0].mxu0
        %v424 = vpop.f32.mrb[0].mxu0
        %v425 = vadd.f32 %v324, %v424
        %v426 = vpop.f32.mrb[0].mxu0
        %427 = vmatprep.mubr.bf16.mxu0 0
        %428 = vmatmul.mubr.bf16.gmra.mrb[0].mxu0 %v336
        %v429 = vpop.f32.mrb[0].mxu0
        %v430 = vadd.f32 %v325, %v429
        %v431 = vpop.f32.mrb[0].mxu0
        %v432 = vpop.f32.mrb[0].mxu0
        %v433 = vadd.f32 %v326, %v432
        %v434 = vpop.f32.mrb[0].mxu0
        %435 = vdwg.mxu0
        %436 = vadd.xlane.f32.xlu0 %v422
        %v437 = vpop.xlane.xlu0 %436
        %438 = vadd.xlane.f32.xlu0 %v425
        %v439 = vpop.xlane.xlu0 %438
        %440 = vadd.xlane.f32.xlu0 %v430
        %v441 = vpop.xlane.xlu0 %440
        %442 = vadd.xlane.f32.xlu0 %v433
        %v443 = vpop.xlane.xlu0 %442
        %v444 = vmul.f32 %v422, %v422
        %v445 = vmul.f32 %v425, %v425
        %v446 = vmul.f32 %v430, %v430
        %v447 = vmul.f32 %v433, %v433
        %448 = vadd.xlane.f32.xlu0 %v444
        %v449 = vpop.xlane.xlu0 %448
        %450 = vadd.xlane.f32.xlu0 %v445
        %v451 = vpop.xlane.xlu0 %450
        %452 = vadd.xlane.f32.xlu0 %v446
        %v453 = vpop.xlane.xlu0 %452
        %454 = vadd.xlane.f32.xlu0 %v447
        %v455 = vpop.xlane.xlu0 %454
        %v456 = vmul.f32 %v437, 0.03125
        %v457 = vmul.f32 %v439, 0.03125
        %v458 = vmul.f32 %v441, 0.03125
        %v459 = vmul.f32 %v443, 0.03125
        %v460 = vmul.f32 %v449, 0.03125
        %v461 = vmul.f32 %v451, 0.03125
        %v462 = vmul.f32 %v453, 0.03125
        %v463 = vmul.f32 %v455, 0.03125
        %v464 = vmul.f32 %v456, %v456
        %v465 = vmul.f32 %v457, %v457
        %v466 = vmul.f32 %v458, %v458
        %v467 = vmul.f32 %v459, %v459
        %v468 = vsub.f32 %v460, %v464
        %v469 = vsub.f32 %v461, %v465
        %v470 = vsub.f32 %v462, %v466
        %v471 = vsub.f32 %v463, %v467
        %v472 = vmax.f32 %v468, 0.0
        %v473 = vmax.f32 %v469, 0.0
        %v474 = vmax.f32 %v470, 0.0
        %v475 = vmax.f32 %v471, 0.0
        %v476 = vsub.f32 %v422, %v456
        %v477 = vsub.f32 %v425, %v457
        %v478 = vsub.f32 %v430, %v458
        %v479 = vsub.f32 %v433, %v459
        %v480 = vadd.f32 %v472, 1e-12
        %v481 = vadd.f32 %v473, 1e-12
        %v482 = vadd.f32 %v474, 1e-12
        %v483 = vadd.f32 %v475, 1e-12
        %v484 = vrsqrt.pop %v480
        %v485 = vrsqrt.pop %v481
        %v486 = vrsqrt.pop %v482
        %v487 = vrsqrt.pop %v483
        %v488 = vmul.f32 %v476, %v484
        %v489 = vmul.f32 %v477, %v485
        %v490 = vmul.f32 %v478, %v486
        %v491 = vmul.f32 %v479, %v487
        %v492 = vld [vmem:[%s3] sm:$0x1]
        %v494 = vlaneseq
        %v495 = vshrl.u32 %v494, 7
        %v496 = vsub.s32 0, %v495
        %v497 = vrot.slane %v492, %v496
        %v499 = vmul.f32 %v488, %v497
        %v500 = vmul.f32 %v489, %v497
        %v501 = vmul.f32 %v490, %v497
        %v502 = vmul.f32 %v491, %v497
        %v503 = vld [vmem:[%s4] sm:$0x1]
        %v505 = vlaneseq
        %v506 = vshrl.u32 %v505, 7
        %v507 = vsub.s32 0, %v506
        %v508 = vrot.slane %v503, %v507
        %v510 = vadd.f32 %v499, %v508
        %v511 = vadd.f32 %v500, %v508
        %v512 = vadd.f32 %v501, %v508
        %v513 = vadd.f32 %v502, %v508
        %v514 = vpack.c.bf16 %v511, %v510
        %v515 = vpack.c.bf16 %v513, %v512
        %v518 = vunpack.c.l.b16 %v514
        %v519 = vunpack.c.h.b16 %v514
        %v520 = vunpack.c.l.b16 %v515
        %v521 = vunpack.c.h.b16 %v515
        %v522 = vpack.c.b16 %v518, %v518
        %v523 = vpack.c.b16 %v519, %v519
        %v524 = vpack.c.b16 %v520, %v520
        %v525 = vpack.c.b16 %v521, %v521
        %530 = vst [vmem:[%s294] sm:$0xf] %v522
        %531 = vst [vmem:[%s294 + $0x4] sm:$0xf] %v523
        %532 = vst [vmem:[%s294 + $0x8] sm:$0xf] %v524
        %533 = vst [vmem:[%s294 + $0xc] sm:$0xf] %v525
        %s534 = sand.u32 %s146, 1
        %s535 = scalar_lea.sflag [#allocation4], %s534
        %s536 = sand.u32 %s146, 1
        %s537 = smul.addr %s536, 16
        %s538 = scalar_lea.vmem [#allocation8], %s537
        // Predicated region
        $region53: #{tpu_custom_call.1} parent=39 // pred_check
          %p539 = pneg %p156
        $region54: #{tpu_custom_call.1} parent=39 // pred_check_branch
          %541 = sbr.rel (%p539) target = $region56
        $region55: #{tpu_custom_call.1} parent=39 // pred_region
          %s542 = smul.u32 4, %s23
          %s544 = ssub.s32 256, 256
          %545 = vsyncadd %s535, %s544
          %s546 = smul.addr %s542, 64
          %s547 = scalar_lea.hbm %s5, %s546
          %s548 = sshll.u32 %s538, 4
          %s549 = int_to_ptr.vmem [resolvable:$true] %s548
          %554 = dma.vmem_to_hbm [thread:$0]  %s549, 256, %s547, %s535, 64, 64, 4
        $region56: #{tpu_custom_call.1} parent=39 // pred_fallthru
          _
      $region40: #{tpu_custom_call.1} parent=5 // pred_fallthru
        _
      %p555 = scmp.le.s32.totalorder 2, %s18
      // Predicated region
      $region57: #{tpu_custom_call.1} parent=5 // pred_check
        %p556 = pneg %p555
      $region58: #{tpu_custom_call.1} parent=5 // pred_check_branch
        %558 = sbr.rel (%p556) target = $region60
      $region59: #{tpu_custom_call.1} parent=5 // pred_region
        %s559 = ssub.s32 %s18, 2
        // Predicated region
        $region61: #{tpu_custom_call.1} parent=59 // pred_check
          %p560 = pneg %p162
        $region62: #{tpu_custom_call.1} parent=59 // pred_check_branch
          %562 = sbr.rel (%p560) target = $region64
        $region63: #{tpu_custom_call.1} parent=59 // pred_region
          %s563 = sand.u32 %s147, 1
          %s564 = scalar_lea.sflag [#allocation4], %s563
          %s565 = sand.u32 %s147, 1
          %s566 = smul.addr %s565, 16
          %s567 = scalar_lea.vmem [#allocation8], %s566
          %568 = dma.done %s564, 256
        $region64: #{tpu_custom_call.1} parent=59 // pred_fallthru
          _
      $region60: #{tpu_custom_call.1} parent=5 // pred_fallthru
        _
    $region6: #{tpu_custom_call.1} parent=1 // loop_footer
      %s22 = sadd.s32 1, %s18
    $region7: #{tpu_custom_call.1} parent=1 // loop_footer_branch
      %17 = sbr.rel target = $region3
    $region8: #{tpu_custom_call.1} parent=1 // loop_exit
      _
    %569 = vsyncpa [#allocation3], 1
    %s570 = scalar_lea.sflag [#allocation3], 1
    %571 = vsyncpa %s570, 1
    %572 = vsyncpa [#allocation6], 1
    %573 = vsyncpa [#allocation4], 1
    %s574 = scalar_lea.sflag [#allocation4], 1
    %575 = vsyncpa %s574, 1

</llo_original>
